<compile_context>
chip_gen: v5e
topology: v5e:2x2
jax: 0.10.0
libtpu: 0.0.40
codegen_flags: <defaults>
</compile_context>

<pallas_src>
import functools
import math

import jax
import jax.numpy as jnp
from jax.experimental import pallas as pl
from jax.experimental.pallas import tpu as pltpu


# ---------------------------------------------------------------------------
# Tiling helper
# ---------------------------------------------------------------------------
def _largest_tile(dim, target, align):
    """Largest multiple of `align` that divides `dim` and is <= `target`.

    Returns `dim` itself when dim <= target (a full-extent block is always
    layout-legal) and None when no aligned divisor exists.
    """
    if dim <= target:
        return dim
    t = (target // align) * align
    while t >= align:
        if dim % t == 0:
            return t
        t -= align
    return None


# ---------------------------------------------------------------------------
# Tiled linear kernel:  y = x @ W + b   (f32 accumulator in VMEM scratch)
# ---------------------------------------------------------------------------
def _linear_kernel(x_ref, w_ref, b_ref, o_ref, acc_ref):
    k = pl.program_id(2)

    @pl.when(k == 0)
    def _():
        acc_ref[...] = jnp.zeros_like(acc_ref)

    acc_ref[...] += jnp.dot(x_ref[...], w_ref[...],
                            preferred_element_type=jnp.float32)

    @pl.when(k == pl.num_programs(2) - 1)
    def _():
        o_ref[...] = (acc_ref[...] + b_ref[...]).astype(o_ref.dtype)


def linear_pallas(x2d, w, b, *, tm=256, tn=256, tk=512):
    """x2d: (M, K), w: (K, N), b: (N,) -> (M, N)."""
    M, K = x2d.shape
    K2, N = w.shape
    assert K == K2 and b.shape == (N,)

    tm_eff = _largest_tile(M, tm, 8)
    if tm_eff is None:
        # Non-round M (= B*S): pad rows instead of letting the block grow to M,
        # so the x tile and f32 accumulator stay bounded in VMEM (the scoped
        # VMEM limit on v5e/v7x is the first thing to break otherwise).
        m_pad = pl.cdiv(M, tm) * tm
        y = linear_pallas(jnp.pad(x2d, ((0, m_pad - M), (0, 0))), w, b,
                          tm=tm, tn=tn, tk=tk)
        return y[:M]
    tn_eff = _largest_tile(N, tn, 128) or N   # model dims: bounded, full is OK
    tk_eff = _largest_tile(K, tk, 128) or K

    grid = (M // tm_eff, N // tn_eff, K // tk_eff)
    b2d = b.reshape(1, N).astype(jnp.float32)   # pre-shaped / pre-cast once

    return pl.pallas_call(
        _linear_kernel,
        out_shape=jax.ShapeDtypeStruct((M, N), x2d.dtype),
        grid_spec=pltpu.PrefetchScalarGridSpec(
            num_scalar_prefetch=0,
            grid=grid,
            in_specs=[
                pl.BlockSpec((tm_eff, tk_eff), lambda i, j, k: (i, k)),
                pl.BlockSpec((tk_eff, tn_eff), lambda i, j, k: (k, j)),
                pl.BlockSpec((1, tn_eff), lambda i, j, k: (0, j)),
            ],
            out_specs=pl.BlockSpec((tm_eff, tn_eff), lambda i, j, k: (i, j)),
            scratch_shapes=[pltpu.VMEM((tm_eff, tn_eff), jnp.float32)],
        ),
        compiler_params=pltpu.CompilerParams(
            dimension_semantics=("parallel", "parallel", "arbitrary")),
    )(x2d, w, b2d)


# ---------------------------------------------------------------------------
# Flash-style attention kernel over head-interleaved (B, S, H*dh) activations
# ---------------------------------------------------------------------------
def _flash_attention_body(q_ref, k_ref, v_ref, mask_ref, o_ref,
                          acc_ref, m_ref, l_ref, *, heads, scale):
    ki = pl.program_id(2)
    dh = q_ref.shape[-1] // heads

    @pl.when(ki == 0)
    def _():
        m_ref[...] = jnp.full(m_ref.shape, -jnp.inf, dtype=m_ref.dtype)
        l_ref[...] = jnp.zeros_like(l_ref)
        acc_ref[...] = jnp.zeros_like(acc_ref)

    # Scale Q (tq x D elements) instead of the (H x tq x tk) score tensor.
    q = q_ref[0] * scale
    k = k_ref[0]
    v = v_ref[0]
    if mask_ref is not None:
        keep = mask_ref[0] != 0                       # (tq, tk), int8 in HBM

    for h in range(heads):                            # static unroll over heads
        cols = slice(h * dh, (h + 1) * dh)
        qh, kh, vh = q[:, cols], k[:, cols], v[:, cols]
        # scores_h = (q_h / sqrt(dh)) @ k_h^T, f32 accumulation on the MXU.
        s = jax.lax.dot_general(qh, kh, (((1,), (1,)), ((), ())),
                                preferred_element_type=jnp.float32)  # (tq, tk)
        if mask_ref is not None:
            # torch: scores.masked_fill(mask.logical_not(), 1e-09) — a fill
            # VALUE, not -inf (kept for exact parity with the reference module).
            s = jnp.where(keep, s, 1e-9)

        m_prev = m_ref[:, h:h + 1]                    # (tq, 1)
        l_prev = l_ref[:, h:h + 1]
        m_new = jnp.maximum(m_prev, jnp.max(s, axis=-1, keepdims=True))
        alpha = jnp.exp(m_prev - m_new)
        p = jnp.exp(s - m_new)                        # (tq, tk)
        m_ref[:, h:h + 1] = m_new
        l_ref[:, h:h + 1] = alpha * l_prev + jnp.sum(p, axis=-1, keepdims=True)
        # Cast the attention weights down to V's dtype (do not upcast V).
        acc_ref[:, cols] = alpha * acc_ref[:, cols] + jnp.dot(
            p.astype(v.dtype), vh, preferred_element_type=jnp.float32)

    @pl.when(ki == pl.num_programs(2) - 1)
    def _():
        # Deferred softmax normalization: only tq x D values get scaled and the
        # store is one lane-dense (tq, D) write directly in (B, Sq, H*dh)
        # layout, so the output projection consumes it with no transpose.
        # (approx=True would move the reciprocal to the EUP if tolerance allows.)
        outs = []
        for h in range(heads):
            cols = slice(h * dh, (h + 1) * dh)
            inv = pl.reciprocal(l_ref[:, h:h + 1], approx=False)
            outs.append(acc_ref[:, cols] * inv)
        o_ref[0] = jnp.concatenate(outs, axis=-1).astype(o_ref.dtype)


def _flash_attn_kernel_masked(q_ref, k_ref, v_ref, mask_ref, o_ref,
                              acc_ref, m_ref, l_ref, *, heads, scale):
    _flash_attention_body(q_ref, k_ref, v_ref, mask_ref, o_ref,
                          acc_ref, m_ref, l_ref, heads=heads, scale=scale)


def _flash_attn_kernel_nomask(q_ref, k_ref, v_ref, o_ref,
                              acc_ref, m_ref, l_ref, *, heads, scale):
    _flash_attention_body(q_ref, k_ref, v_ref, None, o_ref,
                          acc_ref, m_ref, l_ref, heads=heads, scale=scale)


def attention_pallas(q_arr, q_col, k_arr, k_col, v_arr, v_col, *,
                     heads, d_model, sq, sk, mask=None):
    """Multi-head attention over head-interleaved activations.

    q_arr / k_arr / v_arr may be wider fused projection buffers (B, S, n*D);
    the *_col arguments select which D-wide column block holds Q / K / V so the
    fused buffer is read in place (no slicing copies).
    Returns (B, sq, d_model), head-interleaved.
    """
    B = q_arr.shape[0]
    D = d_model
    scale = 1.0 / math.sqrt(D // heads)

    tq = _largest_tile(sq, 128, 8) or sq
    # The mask tile's last dim must be a 128-multiple (or the full Sk).
    tk = (_largest_tile(sk, 512, 128) if mask is not None
          else _largest_tile(sk, 512, 8)) or sk
    grid = (B, sq // tq, sk // tk)

    q_spec = pl.BlockSpec((1, tq, D), lambda b, qi, ki: (b, qi, q_col))
    k_spec = pl.BlockSpec((1, tk, D), lambda b, qi, ki: (b, ki, k_col))
    v_spec = pl.BlockSpec((1, tk, D), lambda b, qi, ki: (b, ki, v_col))
    out_spec = pl.BlockSpec((1, tq, D), lambda b, qi, ki: (b, qi, 0))
    out_shape = jax.ShapeDtypeStruct((B, sq, D), q_arr.dtype)
    scratch = [pltpu.VMEM((tq, D), jnp.float32),       # acc, head-interleaved
               pltpu.VMEM((tq, heads), jnp.float32),   # running max per head
               pltpu.VMEM((tq, heads), jnp.float32)]   # running denom per head
    cp = pltpu.CompilerParams(
        dimension_semantics=("parallel", "parallel", "arbitrary"))

    if mask is not None:
        mask_i8 = mask.astype(jnp.int8)   # 4x less HBM/VMEM than an f32 mask
        return pl.pallas_call(
            functools.partial(_flash_attn_kernel_masked, heads=heads, scale=scale),
            out_shape=out_shape,
            grid_spec=pltpu.PrefetchScalarGridSpec(
                num_scalar_prefetch=0, grid=grid,
                in_specs=[q_spec, k_spec, v_spec,
                          pl.BlockSpec((1, tq, tk), lambda b, qi, ki: (b, qi, ki))],
                out_specs=out_spec, scratch_shapes=scratch),
            compiler_params=cp,
        )(q_arr, k_arr, v_arr, mask_i8)

    return pl.pallas_call(
        functools.partial(_flash_attn_kernel_nomask, heads=heads, scale=scale),
        out_shape=out_shape,
        grid_spec=pltpu.PrefetchScalarGridSpec(
            num_scalar_prefetch=0, grid=grid,
            in_specs=[q_spec, k_spec, v_spec],
            out_specs=out_spec, scratch_shapes=scratch),
        compiler_params=cp,
    )(q_arr, k_arr, v_arr)


# ---------------------------------------------------------------------------
# Full MultiHeadedAttention forward
# ---------------------------------------------------------------------------
def multi_headed_attention_forward(query, key, value, params, heads, mask=None):
    """query/key/value: (B, S, d_model); mask: (B, S_q, S_k) bool or None."""
    B, Sq, D = query.shape
    Sk = key.shape[1]
    assert D % heads == 0

    lane_ok = (D % 128) == 0   # fused buffers need 128-aligned D column blocks

    if (query is key) and (key is value) and lane_ok:
        # Self-attention: one fused QKV matmul; attention reads Q/K/V straight
        # out of the (B, S, 3D) buffer via column-block indices.
        wqkv = jnp.concatenate([params["wq"], params["wk"], params["wv"]], axis=1)
        bqkv = jnp.concatenate([params["bq"], params["bk"], params["bv"]], axis=0)
        qkv = linear_pallas(query.reshape(B * Sq, D), wqkv, bqkv).reshape(B, Sq, 3 * D)
        q_arr, k_arr, v_arr = qkv, qkv, qkv
        qc, kc, vc = 0, 1, 2
    elif (key is value) and lane_ok:
        # Cross-attention with shared K/V source: fuse the K and V projections.
        q_arr = linear_pallas(query.reshape(B * Sq, D),
                              params["wq"], params["bq"]).reshape(B, Sq, D)
        wkv = jnp.concatenate([params["wk"], params["wv"]], axis=1)
        bkv = jnp.concatenate([params["bk"], params["bv"]], axis=0)
        kv = linear_pallas(key.reshape(B * Sk, D), wkv, bkv).reshape(B, Sk, 2 * D)
        k_arr, v_arr = kv, kv
        qc, kc, vc = 0, 0, 1
    else:
        q_arr = linear_pallas(query.reshape(B * Sq, D),
                              params["wq"], params["bq"]).reshape(B, Sq, D)
        k_arr = linear_pallas(key.reshape(B * Sk, D),
                              params["wk"], params["bk"]).reshape(B, Sk, D)
        v_arr = linear_pallas(value.reshape(B * Sk, D),
                              params["wv"], params["bv"]).reshape(B, Sk, D)
        qc, kc, vc = 0, 0, 0

    ctx = attention_pallas(q_arr, qc, k_arr, kc, v_arr, vc,
                           heads=heads, d_model=D, sq=Sq, sk=Sk, mask=mask)
    out2d = linear_pallas(ctx.reshape(B * Sq, D), params["wo"], params["bo"])
    return out2d.reshape(B, Sq, D)


# ---------------------------------------------------------------------------
# Pure-JAX reference (mirrors the PyTorch module, eval mode)
# ---------------------------------------------------------------------------
def mha_reference(query, key, value, params, heads, mask=None):
    B, Sq, D = query.shape
    dh = D // heads

    def lin(x, w, b):
        return x @ w + b

    q = lin(query, params["wq"], params["bq"]).reshape(B, -1, heads, dh).transpose(0, 2, 1, 3)
    k = lin(key, params["wk"], params["bk"]).reshape(B, -1, heads, dh).transpose(0, 2, 1, 3)
    v = lin(value, params["wv"], params["bv"]).reshape(B, -1, heads, dh).transpose(0, 2, 1, 3)
    s = (q @ jnp.swapaxes(k, -2, -1)) / math.sqrt(dh)
    if mask is not None:
        s = jnp.where(mask[:, None, :, :], s, 1e-9)
    a = jax.nn.softmax(s, axis=-1)
    x = (a @ v).transpose(0, 2, 1, 3).reshape(B, -1, heads * dh)
    return lin(x, params["wo"], params["bo"])


# ---------------------------------------------------------------------------
# Main
# ---------------------------------------------------------------------------
if __name__ == "__main__":
    B, S, D_MODEL, HEADS = 2, 16, 128, 4

    root = jax.random.PRNGKey(0)
    (kx, ky, kz, kwq, kwk, kwv, kwo,
     kbq, kbk, kbv, kbo, kmask) = jax.random.split(root, 12)

    x = jax.random.normal(kx, (B, S, D_MODEL), dtype=jnp.float32)
    y = jax.random.normal(ky, (B, S, D_MODEL), dtype=jnp.float32)
    z = jax.random.normal(kz, (B, S, D_MODEL), dtype=jnp.float32)
    wscale = 1.0 / math.sqrt(D_MODEL)
    params = {
        "wq": jax.random.normal(kwq, (D_MODEL, D_MODEL), jnp.float32) * wscale,
        "wk": jax.random.normal(kwk, (D_MODEL, D_MODEL), jnp.float32) * wscale,
        "wv": jax.random.normal(kwv, (D_MODEL, D_MODEL), jnp.float32) * wscale,
        "wo": jax.random.normal(kwo, (D_MODEL, D_MODEL), jnp.float32) * wscale,
        "bq": jax.random.normal(kbq, (D_MODEL,), jnp.float32) * 0.1,
        "bk": jax.random.normal(kbk, (D_MODEL,), jnp.float32) * 0.1,
        "bv": jax.random.normal(kbv, (D_MODEL,), jnp.float32) * 0.1,
        "bo": jax.random.normal(kbo, (D_MODEL,), jnp.float32) * 0.1,
    }
    mask = jax.random.bernoulli(kmask, 0.75, (B, S, S))

    def check(out, ref, name):
        err = float(jnp.max(jnp.abs(out - ref)))
        assert out.shape == ref.shape, f"{name}: shape {out.shape} vs {ref.shape}"
        assert jnp.allclose(out, ref, atol=1e-4, rtol=1e-4), (
            f"{name} mismatch, max err {err}")

    # 1) masked self-attention (fused QKV path, in-place column reads)
    out = jax.block_until_ready(
        multi_headed_attention_forward(x, x, x, params, HEADS, mask=mask))
    check(out, mha_reference(x, x, x, params, HEADS, mask=mask), "masked self-attn")

    # 2) unmasked self-attention
    out_nm = jax.block_until_ready(
        multi_headed_attention_forward(x, x, x, params, HEADS, mask=None))
    check(out_nm, mha_reference(x, x, x, params, HEADS, mask=None), "unmasked self-attn")

    # 3) cross-attention with key is value (fused KV path)
    out_x = jax.block_until_ready(
        multi_headed_attention_forward(x, y, y, params, HEADS, mask=mask))
    check(out_x, mha_reference(x, y, y, params, HEADS, mask=mask), "cross-attn (kv fused)")

    # 4) fully distinct query / key / value (separate projection path)
    out_s = jax.block_until_ready(
        multi_headed_attention_forward(x, y, z, params, HEADS, mask=mask))
    check(out_s, mha_reference(x, y, z, params, HEADS, mask=mask), "cross-attn (separate)")

    print("KERNEL_OK")
</pallas_src>

<mosaic_0001>
module attributes {stable_mosaic.version = 11 : i64} {
  func.func @_linear_kernel(%arg0: i32, %arg1: i32, %arg2: i32, %arg3: memref<32x128xf32, #tpu.memory_space<vmem>>, %arg4: memref<128x128xf32, #tpu.memory_space<vmem>>, %arg5: memref<1x128xf32, #tpu.memory_space<vmem>>, %arg6: memref<32x128xf32, #tpu.memory_space<vmem>>, %arg7: memref<32x128xf32, #tpu.memory_space<vmem>>) attributes {dimension_semantics = [#tpu.dimension_semantics<parallel>, #tpu.dimension_semantics<parallel>, #tpu.dimension_semantics<arbitrary>], iteration_bounds = array<i64: 1, 3, 1>, scalar_prefetch = 0 : i64, scratch_operands = 1 : i64, tpu.core_type = #tpu.core_type<tc>, window_params = [{transform_indices = @transform_0, window_bounds = array<i64: 32, 128>}, {transform_indices = @transform_1, window_bounds = array<i64: 128, 128>}, {transform_indices = @transform_2, window_bounds = array<i64: 1, 128>}, {transform_indices = @transform_3, window_bounds = array<i64: 32, 128>}]} {
    %c0_i32 = arith.constant 0 : i32
    %0 = arith.cmpi eq, %arg2, %c0_i32 : i32
    %1 = arith.extui %0 : i1 to i32
    %c0_i32_0 = arith.constant 0 : i32
    %2 = arith.cmpi ne, %1, %c0_i32_0 : i32
    scf.if %2 {
      %cst_10 = arith.constant 0.000000e+00 : f32
      %12 = vector.broadcast %cst_10 : f32 to vector<32x128xf32>
      %c0_11 = arith.constant 0 : index
      %c0_12 = arith.constant 0 : index
      %13 = vector.load %arg7[%c0_11, %c0_12] : memref<32x128xf32, #tpu.memory_space<vmem>>, vector<32x128xf32>
      tpu.vector_store %arg7[%c0_11, %c0_12], %12 {strides = array<i32>} : memref<32x128xf32, #tpu.memory_space<vmem>>, vector<32x128xf32>,
    } else {
    }
    %c0 = arith.constant 0 : index
    %c0_1 = arith.constant 0 : index
    %3 = vector.load %arg7[%c0, %c0_1] : memref<32x128xf32, #tpu.memory_space<vmem>>, vector<32x128xf32>
    %c0_2 = arith.constant 0 : index
    %c0_3 = arith.constant 0 : index
    %4 = vector.load %arg3[%c0_2, %c0_3] : memref<32x128xf32, #tpu.memory_space<vmem>>, vector<32x128xf32>
    %c0_4 = arith.constant 0 : index
    %c0_5 = arith.constant 0 : index
    %5 = vector.load %arg4[%c0_4, %c0_5] : memref<128x128xf32, #tpu.memory_space<vmem>>, vector<128x128xf32>
    %cst = arith.constant dense<0.000000e+00> : vector<32x128xf32>
    %6 = tpu.matmul %4, %5, %cst {dimension_numbers = #tpu.dot_dimension_numbers<[1], [0], [0], [1], [0, 0, 1, 1], [], []>} : vector<32x128xf32>, vector<128x128xf32>, vector<32x128xf32> -> vector<32x128xf32>
    %7 = arith.addf %3, %6 : vector<32x128xf32>
    %c0_6 = arith.constant 0 : index
    %c0_7 = arith.constant 0 : index
    %8 = vector.load %arg7[%c0_6, %c0_7] : memref<32x128xf32, #tpu.memory_space<vmem>>, vector<32x128xf32>
    tpu.vector_store %arg7[%c0_6, %c0_7], %7 {strides = array<i32>} : memref<32x128xf32, #tpu.memory_space<vmem>>, vector<32x128xf32>,
    %c0_i32_8 = arith.constant 0 : i32
    %9 = arith.cmpi eq, %arg2, %c0_i32_8 : i32
    %10 = arith.extui %9 : i1 to i32
    %c0_i32_9 = arith.constant 0 : i32
    %11 = arith.cmpi ne, %10, %c0_i32_9 : i32
    scf.if %11 {
      %c0_10 = arith.constant 0 : index
      %c0_11 = arith.constant 0 : index
      %12 = vector.load %arg7[%c0_10, %c0_11] : memref<32x128xf32, #tpu.memory_space<vmem>>, vector<32x128xf32>
      %c0_12 = arith.constant 0 : index
      %c0_13 = arith.constant 0 : index
      %13 = vector.load %arg5[%c0_12, %c0_13] : memref<1x128xf32, #tpu.memory_space<vmem>>, vector<1x128xf32>
      %14 = vector.broadcast %13 : vector<1x128xf32> to vector<32x128xf32>
      %15 = arith.addf %12, %14 : vector<32x128xf32>
      %c0_14 = arith.constant 0 : index
      %c0_15 = arith.constant 0 : index
      %16 = vector.load %arg6[%c0_14, %c0_15] : memref<32x128xf32, #tpu.memory_space<vmem>>, vector<32x128xf32>
      tpu.vector_store %arg6[%c0_14, %c0_15], %15 {strides = array<i32>} : memref<32x128xf32, #tpu.memory_space<vmem>>, vector<32x128xf32>,
    } else {
    }
    return
  }
  func.func @transform_0(%arg0: i32, %arg1: i32, %arg2: i32) -> (i32, i32) {
    %c0_i32 = arith.constant 0 : i32
    return %arg0, %arg2 : i32, i32
  }
  func.func @transform_1(%arg0: i32, %arg1: i32, %arg2: i32) -> (i32, i32) {
    %c0_i32 = arith.constant 0 : i32
    return %arg2, %arg1 : i32, i32
  }
  func.func @transform_2(%arg0: i32, %arg1: i32, %arg2: i32) -> (i32, i32) {
    %c0_i32 = arith.constant 0 : i32
    %c0_i32_0 = arith.constant 0 : i32
    return %c0_i32, %arg1 : i32, i32
  }
  func.func @transform_3(%arg0: i32, %arg1: i32, %arg2: i32) -> (i32, i32) {
    %c0_i32 = arith.constant 0 : i32
    return %arg0, %arg1 : i32, i32
  }
}

</mosaic_0001>

<llo_original>
// kernel: tpu_custom_call.1
$region0: #{tpu_custom_call.1}
  #allocation0 [shape = 'u32[]', space=smem, size = 0x4, offset = 0x4, fixed_abs, tag = 'smem constant byte address 0x4 - core index']
  #allocation1 [shape = 'u32[72,128]{1,0:T(1,128)}', space=vmem, size = 0x9000, scoped, tag = 'internal scratch']
  #allocation2 [shape = 'f32[32,128]{1,0:T(8,128)}', space=vmem, size = 0x4000, scoped, tag = 'scratch operand']
  %s0 = inlined_call_operand.hbm [shape: f32[32,128], index: 0, kind: input, shape index: {}]
  %s1 = inlined_call_operand.hbm [shape: f32[128,384], index: 1, kind: input, shape index: {}]
  %s2 = inlined_call_operand.hbm [shape: f32[1,384], index: 2, kind: input, shape index: {}]
  %s3 = inlined_call_operand.hbm [shape: f32[32,384], index: 3, kind: output, shape index: {}]
  %s4 = sld [smem:[#allocation0]]
  $region65: #{tpu_custom_call.1} parent=0
    _
  %s6 = ssub.s32 1, %s4
  %s7 = scalar_select 0, %s6, %s4
  $region1: #{tpu_custom_call.1} parent=0
    #allocation3 [shape = 'u8[16384]{0}', space=vmem, size = 0x4000, scoped, tag = 'input window, operand 0, single buffered']
    #allocation4 [shape = 's32[2]{0}', space=sflag, size = 0x8, scoped, tag = 'scoped memory for tpu_custom_call.1']
    #allocation5 [shape = 's32[2]{0}', space=sflag, size = 0x8, scoped, tag = 'scoped memory for tpu_custom_call.1']
    #allocation6 [shape = 'u8[131072]{0}', space=vmem, size = 0x20000, scoped, tag = 'input window, operand 1']
    #allocation7 [shape = 's32[2]{0}', space=sflag, size = 0x8, scoped, tag = 'scoped memory for tpu_custom_call.1']
    #allocation8 [shape = 'u8[1024]{0}', space=vmem, size = 0x400, scoped, tag = 'input window, operand 2']
    #allocation9 [shape = 'u8[32768]{0}', space=vmem, size = 0x8000, scoped, tag = 'output window, operand 0']
    %8 = vsyncpa [#allocation4], 0
    %9 = vsyncpa [#allocation7], 0
    %s10 = scalar_lea.sflag [#allocation7], 1
    %11 = vsyncpa %s10, 0
    %12 = vsyncpa [#allocation5], 0
    %s13 = scalar_lea.sflag [#allocation5], 1
    %14 = vsyncpa %s13, 0
    loop: start=0, step=1, limit=5
    $region2: #{tpu_custom_call.1} parent=1 // loop_pre_header
      _
    $region3: #{tpu_custom_call.1} parent=1 // loop_header
      %s16 = sphi 0, %s20
      %p17 = scmp.ge.s32.totalorder %s16, 5
      %s23 = sphi 0, %s42
      %s24 = sphi 0, %s38
      %s25 = sphi 0, %s34
      %s26 = sphi 0, %s23
      %s27 = sphi 0, %s24
      %s28 = sphi 0, %s25
      %s29 = sphi 0, %s26
      %s30 = sphi 0, %s27
      %s31 = sphi 0, %s28
      %s47 = sphi 0, %s49
      %s50 = sphi 0, %s47
      %s51 = sphi 0, %s50
      %s67 = sphi 0, %s51
      %s75 = sphi 0, %s77
      %s78 = sphi 0, %s75
      %s79 = sphi 0, %s78
      %s95 = sphi 0, %s79
      %s101 = sphi 0, %s103
      %s104 = sphi 0, %s101
      %s105 = sphi 0, %s104
      %s121 = sphi 0, %s105
      %s129 = sphi 0, %s131
      %s132 = sphi 0, %s129
      %s133 = sphi 0, %s132
      %s149 = sphi 0, %s133
    $region4: #{tpu_custom_call.1} parent=1 // loop_header_branch
      %19 = sbr.rel (%p17) target = $region8
    $region5: #{tpu_custom_call.1} parent=1 // loop_body
      %s21 = ssub.s32 %s16, 1
      %s22 = ssub.s32 %s16, 2
      %s32 = sadd.s32 1, %s25
      %p33 = scmp.ge.s32.totalorder %s32, 1
      %s34 = scalar_select %p33, 0, %s32
      %s35 = sadd.s32 1, %s24
      %s36 = scalar_select %p33, %s35, %s24
      %p37 = scmp.ge.s32.totalorder %s36, 3
      %s38 = scalar_select %p37, 0, %s36
      %s39 = sadd.s32 1, %s23
      %s40 = scalar_select %p37, %s39, %s23
      %p41 = scmp.ge.s32.totalorder %s40, 1
      %s42 = scalar_select %p41, 0, %s40
      %s43 = ssub.s32 %s23, %s42
      %s44 = ssub.s32 %s25, %s34
      %s45 = sor.u32 %s43, %s44
      %p46 = scmp.eq.s32.totalorder %s45, 0
      %s48 = sadd.s32 %s47, 1
      %s49 = scalar_select %p46, %s47, %s48
      %p52 = pneg %p46
      %p53 = scmp.eq.s32.totalorder %s16, 2
      %p54 = por %p52, %p53
      %p55 = scmp.ne.s32.totalorder %s47, %s50
      %p56 = scmp.eq.s32.totalorder %s16, 0
      %p57 = por %p55, %p56
      %p58 = scmp.ne.s32.totalorder %s47, %s50
      %p59 = scmp.eq.s32.totalorder %s21, 2
      %p60 = por %p58, %p59
      %p61 = scmp.ne.s32.totalorder %s50, %s51
      %p62 = scmp.eq.s32.totalorder %s21, 0
      %p63 = por %p61, %p62
      %p64 = scmp.ne.s32.totalorder %s50, %s51
      %p65 = scmp.eq.s32.totalorder %s22, 2
      %p66 = por %p64, %p65
      %p68 = scmp.ne.s32.totalorder %s51, %s67
      %p69 = scmp.eq.s32.totalorder %s22, 0
      %p70 = por %p68, %p69
      %s71 = ssub.s32 %s25, %s34
      %s72 = ssub.s32 %s24, %s38
      %s73 = sor.u32 %s71, %s72
      %p74 = scmp.eq.s32.totalorder %s73, 0
      %s76 = sadd.s32 %s75, 1
      %s77 = scalar_select %p74, %s75, %s76
      %p80 = pneg %p74
      %p81 = scmp.eq.s32.totalorder %s16, 2
      %p82 = por %p80, %p81
      %p83 = scmp.ne.s32.totalorder %s75, %s78
      %p84 = scmp.eq.s32.totalorder %s16, 0
      %p85 = por %p83, %p84
      %p86 = scmp.ne.s32.totalorder %s75, %s78
      %p87 = scmp.eq.s32.totalorder %s21, 2
      %p88 = por %p86, %p87
      %p89 = scmp.ne.s32.totalorder %s78, %s79
      %p90 = scmp.eq.s32.totalorder %s21, 0
      %p91 = por %p89, %p90
      %p92 = scmp.ne.s32.totalorder %s78, %s79
      %p93 = scmp.eq.s32.totalorder %s22, 2
      %p94 = por %p92, %p93
      %p96 = scmp.ne.s32.totalorder %s79, %s95
      %p97 = scmp.eq.s32.totalorder %s22, 0
      %p98 = por %p96, %p97
      %s99 = ssub.s32 %s24, %s38
      %p100 = scmp.eq.s32.totalorder %s99, 0
      %s102 = sadd.s32 %s101, 1
      %s103 = scalar_select %p100, %s101, %s102
      %p106 = pneg %p100
      %p107 = scmp.eq.s32.totalorder %s16, 2
      %p108 = por %p106, %p107
      %p109 = scmp.ne.s32.totalorder %s101, %s104
      %p110 = scmp.eq.s32.totalorder %s16, 0
      %p111 = por %p109, %p110
      %p112 = scmp.ne.s32.totalorder %s101, %s104
      %p113 = scmp.eq.s32.totalorder %s21, 2
      %p114 = por %p112, %p113
      %p115 = scmp.ne.s32.totalorder %s104, %s105
      %p116 = scmp.eq.s32.totalorder %s21, 0
      %p117 = por %p115, %p116
      %p118 = scmp.ne.s32.totalorder %s104, %s105
      %p119 = scmp.eq.s32.totalorder %s22, 2
      %p120 = por %p118, %p119
      %p122 = scmp.ne.s32.totalorder %s105, %s121
      %p123 = scmp.eq.s32.totalorder %s22, 0
      %p124 = por %p122, %p123
      %s125 = ssub.s32 %s23, %s42
      %s126 = ssub.s32 %s24, %s38
      %s127 = sor.u32 %s125, %s126
      %p128 = scmp.eq.s32.totalorder %s127, 0
      %s130 = sadd.s32 %s129, 1
      %s131 = scalar_select %p128, %s129, %s130
      %p134 = pneg %p128
      %p135 = scmp.eq.s32.totalorder %s16, 2
      %p136 = por %p134, %p135
      %p137 = scmp.ne.s32.totalorder %s129, %s132
      %p138 = scmp.eq.s32.totalorder %s16, 0
      %p139 = por %p137, %p138
      %p140 = scmp.ne.s32.totalorder %s129, %s132
      %p141 = scmp.eq.s32.totalorder %s21, 2
      %p142 = por %p140, %p141
      %p143 = scmp.ne.s32.totalorder %s132, %s133
      %p144 = scmp.eq.s32.totalorder %s21, 0
      %p145 = por %p143, %p144
      %p146 = scmp.ne.s32.totalorder %s132, %s133
      %p147 = scmp.eq.s32.totalorder %s22, 2
      %p148 = por %p146, %p147
      %p150 = scmp.ne.s32.totalorder %s133, %s149
      %p151 = scmp.eq.s32.totalorder %s22, 0
      %p152 = por %p150, %p151
      %p153 = scmp.le.s32.totalorder 1, %s16
      %p154 = scmp.lt.s32.totalorder %s16, 4
      %p155 = pnand %p153, %p154
      %p156 = pneg %p155
      // Predicated region
      $region9: #{tpu_custom_call.1} parent=5 // pred_check
        _
      $region10: #{tpu_custom_call.1} parent=5 // pred_check_branch
        %158 = sbr.rel (%p155) target = $region12
      $region11: #{tpu_custom_call.1} parent=5 // pred_region
        %s159 = ssub.s32 %s16, 1
        // Predicated region
        $region13: #{tpu_custom_call.1} parent=11 // pred_check
          %p160 = pneg %p63
        $region14: #{tpu_custom_call.1} parent=11 // pred_check_branch
          %162 = sbr.rel (%p160) target = $region16
        $region15: #{tpu_custom_call.1} parent=11 // pred_region
          %s163 = smul.u32 4, %s26
          %165 = vsyncadd [#allocation4], 0
          %s166 = sadd.s32 %s28, %s163
          %s167 = smul.addr %s166, 8
          %s168 = scalar_lea.hbm %s0, %s167
          %s169 = sshll.u32 %s168, 4
          %s170 = int_to_ptr.hbm [resolvable:$true] %s169
          %s171 = sshll.u32 [#allocation3], 4
          %s172 = int_to_ptr.vmem [resolvable:$true] %s171
          %177 = dma.hbm_to_vmem [thread:$0]  %s170, 512, %s172, [#allocation4], 128, 128, 8
        $region16: #{tpu_custom_call.1} parent=11 // pred_fallthru
          _
      $region12: #{tpu_custom_call.1} parent=5 // pred_fallthru
        _
      %p178 = scmp.lt.s32.totalorder %s16, 3
      // Predicated region
      $region17: #{tpu_custom_call.1} parent=5 // pred_check
        %p179 = pneg %p178
      $region18: #{tpu_custom_call.1} parent=5 // pred_check_branch
        %181 = sbr.rel (%p179) target = $region20
      $region19: #{tpu_custom_call.1} parent=5 // pred_region
        // Predicated region
        $region21: #{tpu_custom_call.1} parent=19 // pred_check
          %p182 = pneg %p85
        $region22: #{tpu_custom_call.1} parent=19 // pred_check_branch
          %184 = sbr.rel (%p182) target = $region24
        $region23: #{tpu_custom_call.1} parent=19 // pred_region
          %s185 = sand.u32 %s16, 1
          %s186 = scalar_lea.sflag [#allocation7], %s185
          %s187 = sand.u32 %s75, 1
          %s188 = smul.addr %s187, 128
          %s189 = scalar_lea.vmem [#allocation6], %s188
          %s190 = smul.u32 16, %s25
          %192 = vsyncadd %s186, 0
          %s193 = smul.addr %s190, 3
          %s194 = sadd.s32 %s24, %s193
          %s195 = smul.addr %s194, 8
          %s196 = scalar_lea.hbm %s1, %s195
          %s197 = sshll.u32 %s196, 4
          %s198 = int_to_ptr.hbm [resolvable:$true] %s197
          %s199 = sshll.u32 %s189, 4
          %s200 = int_to_ptr.vmem [resolvable:$true] %s199
          %205 = dma.hbm_to_vmem [thread:$0]  %s198, 2048, %s200, %s186, 384, 128, 8
        $region24: #{tpu_custom_call.1} parent=19 // pred_fallthru
          _
        // Predicated region
        $region25: #{tpu_custom_call.1} parent=19 // pred_check
          %p206 = pneg %p111
        $region26: #{tpu_custom_call.1} parent=19 // pred_check_branch
          %208 = sbr.rel (%p206) target = $region28
        $region27: #{tpu_custom_call.1} parent=19 // pred_region
          %s209 = sand.u32 %s16, 1
          %s210 = scalar_lea.sflag [#allocation7], %s209
          %s211 = sand.u32 %s101, 1
          %s212 = scalar_lea.vmem [#allocation8], %s211
          %214 = vsyncadd %s210, 0
          %s215 = scalar_lea.hbm %s2, %s24
          %s217 = sshll.u32 %s215, 4
          %s218 = int_to_ptr.hbm [resolvable:$true] %s217
          %s219 = sshll.u32 %s212, 4
          %s220 = int_to_ptr.vmem [resolvable:$true] %s219
          %222 = dma.hbm_to_vmem [thread:$0]  %s218, 16, %s220, %s210
        $region28: #{tpu_custom_call.1} parent=19 // pred_fallthru
          _
      $region20: #{tpu_custom_call.1} parent=5 // pred_fallthru
        _
      %p223 = scmp.le.s32.totalorder 1, %s16
      %p224 = scmp.lt.s32.totalorder %s16, 4
      %p225 = pnand %p223, %p224
      %p226 = pneg %p225
      // Predicated region
      $region29: #{tpu_custom_call.1} parent=5 // pred_check
        _
      $region30: #{tpu_custom_call.1} parent=5 // pred_check_branch
        %228 = sbr.rel (%p225) target = $region32
      $region31: #{tpu_custom_call.1} parent=5 // pred_region
        %s229 = ssub.s32 %s16, 1
        // Predicated region
        $region33: #{tpu_custom_call.1} parent=31 // pred_check
          %p230 = pneg %p63
        $region34: #{tpu_custom_call.1} parent=31 // pred_check_branch
          %232 = sbr.rel (%p230) target = $region36
        $region35: #{tpu_custom_call.1} parent=31 // pred_region
          %234 = dma.done [#allocation4], 512
        $region36: #{tpu_custom_call.1} parent=31 // pred_fallthru
          _
        %s235 = sand.u32 %s21, 1
        %s236 = scalar_lea.sflag [#allocation7], %s235
        %s237 = sand.u32 %s78, 1
        %s238 = smul.addr %s237, 128
        %s239 = scalar_lea.vmem [#allocation6], %s238
        // Predicated region
        $region37: #{tpu_custom_call.1} parent=31 // pred_check
          %p240 = pneg %p91
        $region38: #{tpu_custom_call.1} parent=31 // pred_check_branch
          %242 = sbr.rel (%p240) target = $region40
        $region39: #{tpu_custom_call.1} parent=31 // pred_region
          %244 = dma.done %s236, 2048
        $region40: #{tpu_custom_call.1} parent=31 // pred_fallthru
          _
        %s245 = sand.u32 %s21, 1
        %s246 = scalar_lea.sflag [#allocation7], %s245
        %s247 = sand.u32 %s104, 1
        %s248 = scalar_lea.vmem [#allocation8], %s247
        // Predicated region
        $region41: #{tpu_custom_call.1} parent=31 // pred_check
          %p249 = pneg %p117
        $region42: #{tpu_custom_call.1} parent=31 // pred_check_branch
          %251 = sbr.rel (%p249) target = $region44
        $region43: #{tpu_custom_call.1} parent=31 // pred_region
          %253 = dma.done %s246, 16
        $region44: #{tpu_custom_call.1} parent=31 // pred_fallthru
          _
        %p254 = pneg %p63
        %p255 = pneg %p60
        %s256 = sand.u32 %s21, 1
        %s257 = scalar_lea.sflag [#allocation7], %s256
        %s258 = sand.u32 %s78, 1
        %s259 = smul.addr %s258, 128
        %s260 = scalar_lea.vmem [#allocation6], %s259
        %p261 = pneg %p91
        %p262 = pneg %p88
        %s263 = sand.u32 %s21, 1
        %s264 = scalar_lea.sflag [#allocation7], %s263
        %s265 = sand.u32 %s104, 1
        %s266 = scalar_lea.vmem [#allocation8], %s265
        %p267 = pneg %p117
        %p268 = pneg %p114
        %p269 = pneg %p145
        %p270 = pneg %p142
        %s271 = sand.u32 %s132, 1
        %s272 = scalar_lea.sflag [#allocation5], %s271
        %s273 = sand.u32 %s132, 1
        %s274 = smul.addr %s273, 32
        %s275 = scalar_lea.vmem [#allocation9], %s274
        %s276 = smul.u32 4, %s26
        %s277 = smul.u32 16, %s28
        %s278 = smul.u32 4, %s26
        %p279 = scmp.eq.s32.totalorder %s28, 0
        // Predicated region
        $region45: #{tpu_custom_call.1} parent=31 // pred_check
          %p280 = pneg %p279
        $region46: #{tpu_custom_call.1} parent=31 // pred_check_branch
          %282 = sbr.rel (%p280) target = $region48
        $region47: #{tpu_custom_call.1} parent=31 // pred_region
          %283 = vst [vmem:[#allocation2] sm:$0xff] 0.0
          %284 = vst [vmem:[#allocation2 + $0x8] sm:$0xff] 0.0
          %285 = vst [vmem:[#allocation2 + $0x10] sm:$0xff] 0.0
          %286 = vst [vmem:[#allocation2 + $0x18] sm:$0xff] 0.0
        $region48: #{tpu_custom_call.1} parent=31 // pred_fallthru
          _
        %v287 = vld [vmem:[#allocation2] sm:$0xff]
        %v288 = vld [vmem:[#allocation2 + $0x8] sm:$0xff]
        %v289 = vld [vmem:[#allocation2 + $0x10] sm:$0xff]
        %v290 = vld [vmem:[#allocation2 + $0x18] sm:$0xff]
        %v291 = vld [vmem:[#allocation3] sm:$0xff]
        %v292 = vld [vmem:[#allocation3 + $0x8] sm:$0xff]
        %v293 = vld [vmem:[#allocation3 + $0x10] sm:$0xff]
        %v294 = vld [vmem:[#allocation3 + $0x18] sm:$0xff]
        %v295 = vld [vmem:[%s239] sm:$0xff]
        %v296 = vld [vmem:[%s239 + $0x8] sm:$0xff]
        %v297 = vld [vmem:[%s239 + $0x10] sm:$0xff]
        %v298 = vld [vmem:[%s239 + $0x18] sm:$0xff]
        %v299 = vld [vmem:[%s239 + $0x20] sm:$0xff]
        %v300 = vld [vmem:[%s239 + $0x28] sm:$0xff]
        %v301 = vld [vmem:[%s239 + $0x30] sm:$0xff]
        %v302 = vld [vmem:[%s239 + $0x38] sm:$0xff]
        %v303 = vld [vmem:[%s239 + $0x40] sm:$0xff]
        %v304 = vld [vmem:[%s239 + $0x48] sm:$0xff]
        %v305 = vld [vmem:[%s239 + $0x50] sm:$0xff]
        %v306 = vld [vmem:[%s239 + $0x58] sm:$0xff]
        %v307 = vld [vmem:[%s239 + $0x60] sm:$0xff]
        %v308 = vld [vmem:[%s239 + $0x68] sm:$0xff]
        %v309 = vld [vmem:[%s239 + $0x70] sm:$0xff]
        %v310 = vld [vmem:[%s239 + $0x78] sm:$0xff]
        %311 = vmatpush.msra.mxu0 %v310
        %312 = vmatpush.msra.mxu0 %v309
        %313 = vmatpush.msra.mxu0 %v308
        %314 = vmatpush.msra.mxu0 %v307
        %315 = vmatpush.msra.mxu0 %v306
        %316 = vmatpush.msra.mxu0 %v305
        %317 = vmatpush.msra.mxu0 %v304
        %318 = vmatpush.msra.mxu0 %v303
        %319 = vmatpush.msra.mxu0 %v302
        %320 = vmatpush.msra.mxu0 %v301
        %321 = vmatpush.msra.mxu0 %v300
        %322 = vmatpush.msra.mxu0 %v299
        %323 = vmatpush.msra.mxu0 %v298
        %324 = vmatpush.msra.mxu0 %v297
        %325 = vmatpush.msra.mxu0 %v296
        %326 = vmatpush.msra.mxu0 %v295
        %327 = vmatmul.f32.gmra.mxu0 %v291
        %v328 = vpop.f32.mrf.mxu0
        %v329 = vadd.f32 0.0, %v328
        %330 = vmatmul.f32.gmra.mxu0 %v292
        %v331 = vpop.f32.mrf.mxu0
        %v332 = vadd.f32 0.0, %v331
        %333 = vmatmul.f32.gmra.mxu0 %v293
        %v334 = vpop.f32.mrf.mxu0
        %v335 = vadd.f32 0.0, %v334
        %336 = vmatmul.f32.gmra.mxu0 %v294
        %v337 = vpop.f32.mrf.mxu0
        %v338 = vadd.f32 0.0, %v337
        %339 = vdwg.mxu0
        %v340 = vadd.f32 %v287, %v329
        %v341 = vadd.f32 %v288, %v332
        %v342 = vadd.f32 %v289, %v335
        %v343 = vadd.f32 %v290, %v338
        %344 = vst [vmem:[#allocation2] sm:$0xff] %v340
        %345 = vst [vmem:[#allocation2 + $0x8] sm:$0xff] %v341
        %346 = vst [vmem:[#allocation2 + $0x10] sm:$0xff] %v342
        %347 = vst [vmem:[#allocation2 + $0x18] sm:$0xff] %v343
        // Predicated region
        $region49: #{tpu_custom_call.1} parent=31 // pred_check
          %p348 = pneg %p279
        $region50: #{tpu_custom_call.1} parent=31 // pred_check_branch
          %350 = sbr.rel (%p348) target = $region52
        $region51: #{tpu_custom_call.1} parent=31 // pred_region
          %v351 = vld [vmem:[#allocation2] sm:$0xff]
          %v352 = vld [vmem:[#allocation2 + $0x8] sm:$0xff]
          %v353 = vld [vmem:[#allocation2 + $0x10] sm:$0xff]
          %v354 = vld [vmem:[#allocation2 + $0x18] sm:$0xff]
          %v355 = vld [vmem:[%s248] sm:$0x1]
          %v357 = vperm.slane %v355, 0
          %v359 = vadd.f32 %v351, %v357
          %v360 = vadd.f32 %v352, %v357
          %v361 = vadd.f32 %v353, %v357
          %v362 = vadd.f32 %v354, %v357
          %363 = vst [vmem:[%s275] sm:$0xff] %v359
          %364 = vst [vmem:[%s275 + $0x8] sm:$0xff] %v360
          %365 = vst [vmem:[%s275 + $0x10] sm:$0xff] %v361
          %366 = vst [vmem:[%s275 + $0x18] sm:$0xff] %v362
        $region52: #{tpu_custom_call.1} parent=31 // pred_fallthru
          _
        %s367 = sand.u32 %s132, 1
        %s368 = scalar_lea.sflag [#allocation5], %s367
        %s369 = sand.u32 %s132, 1
        %s370 = smul.addr %s369, 32
        %s371 = scalar_lea.vmem [#allocation9], %s370
        // Predicated region
        $region53: #{tpu_custom_call.1} parent=31 // pred_check
          %p372 = pneg %p142
        $region54: #{tpu_custom_call.1} parent=31 // pred_check_branch
          %374 = sbr.rel (%p372) target = $region56
        $region55: #{tpu_custom_call.1} parent=31 // pred_region
          %s375 = smul.u32 4, %s26
          %377 = vsyncadd %s368, 0
          %s378 = smul.addr %s375, 3
          %s379 = sadd.s32 %s27, %s378
          %s380 = smul.addr %s379, 8
          %s381 = scalar_lea.hbm %s3, %s380
          %s382 = sshll.u32 %s371, 4
          %s383 = int_to_ptr.vmem [resolvable:$true] %s382
          %s384 = sshll.u32 %s381, 4
          %s385 = int_to_ptr.hbm [resolvable:$true] %s384
          %390 = dma.vmem_to_hbm [thread:$0]  %s383, 512, %s385, %s368, 128, 384, 8
        $region56: #{tpu_custom_call.1} parent=31 // pred_fallthru
          _
      $region32: #{tpu_custom_call.1} parent=5 // pred_fallthru
        _
      %p391 = scmp.le.s32.totalorder 2, %s16
      // Predicated region
      $region57: #{tpu_custom_call.1} parent=5 // pred_check
        %p392 = pneg %p391
      $region58: #{tpu_custom_call.1} parent=5 // pred_check_branch
        %394 = sbr.rel (%p392) target = $region60
      $region59: #{tpu_custom_call.1} parent=5 // pred_region
        %s395 = ssub.s32 %s16, 2
        // Predicated region
        $region61: #{tpu_custom_call.1} parent=59 // pred_check
          %p396 = pneg %p148
        $region62: #{tpu_custom_call.1} parent=59 // pred_check_branch
          %398 = sbr.rel (%p396) target = $region64
        $region63: #{tpu_custom_call.1} parent=59 // pred_region
          %s399 = sand.u32 %s133, 1
          %s400 = scalar_lea.sflag [#allocation5], %s399
          %s401 = sand.u32 %s133, 1
          %s402 = smul.addr %s401, 32
          %s403 = scalar_lea.vmem [#allocation9], %s402
          %405 = dma.done %s400, 512
        $region64: #{tpu_custom_call.1} parent=59 // pred_fallthru
          _
      $region60: #{tpu_custom_call.1} parent=5 // pred_fallthru
        _
    $region6: #{tpu_custom_call.1} parent=1 // loop_footer
      %s20 = sadd.s32 1, %s16
    $region7: #{tpu_custom_call.1} parent=1 // loop_footer_branch
      %15 = sbr.rel target = $region3
    $region8: #{tpu_custom_call.1} parent=1 // loop_exit
      _
    %406 = vsyncpa [#allocation4], 1
    %s407 = scalar_lea.sflag [#allocation4], 1
    %408 = vsyncpa %s407, 1
    %409 = vsyncpa [#allocation7], 1
    %s410 = scalar_lea.sflag [#allocation7], 1
    %411 = vsyncpa %s410, 1
    %412 = vsyncpa [#allocation5], 1
    %s413 = scalar_lea.sflag [#allocation5], 1
    %414 = vsyncpa %s413, 1

</llo_original>
